<compile_context>
chip_gen: v5e
topology: v5e:2x2
jax: 0.10.0
libtpu: 0.0.40
codegen_flags: <defaults>
</compile_context>

<pallas_src>
import functools

import jax
import jax.numpy as jnp
from jax.experimental import pallas as pl
from jax.experimental.pallas import tpu as pltpu


def _round_up(v, m):
    return (v + m - 1) // m * m


def _pick_tile(dim_padded, candidates=(512, 256, 128)):
    # dim_padded is always a multiple of 128, so this always succeeds.
    for c in candidates:
        if dim_padded % c == 0:
            return c
    return dim_padded


def _conv_matmul_kernel(w_ref, p_ref, b_ref, o_ref, acc_ref):
    # w_ref:   (OCp, TK)  bf16   weight tile
    # p_ref:   (TK,  TM)  bf16   im2col patch tile (batch dim squeezed)
    # b_ref:   (OCp, 1)   f32    bias (resident across the whole grid)
    # o_ref:   (OCp, TM)         output tile (batch dim squeezed)
    # acc_ref: (OCp, TM)  f32    VMEM accumulator scratch
    k = pl.program_id(2)

    @pl.when(k == 0)
    def _init():
        acc_ref[...] = jnp.zeros_like(acc_ref)

    acc_ref[...] += jnp.dot(w_ref[...], p_ref[...],
                            preferred_element_type=jnp.float32)

    @pl.when(k == pl.num_programs(2) - 1)
    def _finalize():
        # bias added exactly once per output tile, in f32, then cast on store
        o_ref[...] = (acc_ref[...] + b_ref[...]).astype(o_ref.dtype)


@functools.partial(jax.jit,
                   static_argnames=("stride", "padding", "compute_dtype"))
def conv2d_pallas(x, weight, bias, stride=2, padding=1,
                  compute_dtype=jnp.bfloat16):
    """Forward of nn.Conv2d(kernel_size=KHxKW, stride, padding), NCHW in/out."""
    N, C, H, W = x.shape
    OC, C_w, KH, KW = weight.shape
    assert C == C_w
    OH = (H + 2 * padding - KH) // stride + 1
    OW = (W + 2 * padding - KW) // stride + 1
    K = C * KH * KW
    M = OH * OW

    # --- glue: zero-pad + im2col, built straight into the (N, K, M) layout ---
    # NOTE: fully fusing patch extraction into the kernel (manual strided DMAs
    # over x_pad) would avoid materializing the duplicated patch array in HBM;
    # kept as plain JAX glue here, but with no extra transpose passes.
    x_pad = jnp.pad(x, ((0, 0), (0, 0), (padding, padding), (padding, padding)))
    cols = []
    for kh in range(KH):
        for kw in range(KW):
            cols.append(
                x_pad[:, :, kh:kh + stride * OH:stride, kw:kw + stride * OW:stride]
            )
    # ordering matches weight.reshape(OC, C*KH*KW): index = c*KH*KW + kh*KW + kw
    patches = jnp.stack(cols, axis=2).reshape(N, K, M)

    # --- pad to MXU / lane-friendly sizes (zero padding is numerically exact) --
    K_pad = _round_up(K, 128)    # contraction dim -> full-width MXU feeds
    M_pad = _round_up(M, 128)    # output lane dim -> unmasked full-width stores
    OC_pad = _round_up(OC, 8)    # output sublane dim

    patches = jnp.pad(patches, ((0, 0), (0, K_pad - K), (0, M_pad - M)))
    patches = patches.astype(compute_dtype)
    w2 = jnp.pad(weight.reshape(OC, K), ((0, OC_pad - OC), (0, K_pad - K)))
    w2 = w2.astype(compute_dtype)
    b2 = jnp.pad(bias, (0, OC_pad - OC)).reshape(OC_pad, 1).astype(jnp.float32)

    TK = _pick_tile(K_pad)
    TM = _pick_tile(M_pad)
    grid = (N, M_pad // TM, K_pad // TK)

    flops = 2 * N * OC_pad * K_pad * M_pad
    bytes_accessed = (patches.size * patches.dtype.itemsize
                      + w2.size * w2.dtype.itemsize
                      + b2.size * 4
                      + N * OC_pad * M_pad * x.dtype.itemsize)

    out_padded = pl.pallas_call(
        _conv_matmul_kernel,
        out_shape=jax.ShapeDtypeStruct((N, OC_pad, M_pad), x.dtype),
        grid_spec=pltpu.PrefetchScalarGridSpec(
            num_scalar_prefetch=0,
            grid=grid,
            in_specs=[
                # weight tile: constant over (n, m), walks the K axis
                pl.BlockSpec((OC_pad, TK), lambda n, m, k: (0, k)),
                # im2col patch tile (batch dim squeezed out of the kernel Ref)
                pl.BlockSpec((None, TK, TM), lambda n, m, k: (n, k, m)),
                # bias: block index never changes -> DMA'd once, stays resident
                pl.BlockSpec((OC_pad, 1), lambda n, m, k: (0, 0)),
            ],
            out_specs=pl.BlockSpec((None, OC_pad, TM), lambda n, m, k: (n, 0, m)),
            scratch_shapes=[pltpu.VMEM((OC_pad, TM), jnp.float32)],
        ),
        compiler_params=pltpu.CompilerParams(
            # N and M tiles are independent -> megacore-shardable on v7x;
            # K is the reduction axis.
            dimension_semantics=("parallel", "parallel", "arbitrary"),
            # explicit budget that fits v5e/v6e/v7x scoped VMEM with the
            # double-buffered (OC_pad,TK)/(TK,TM)/(OC_pad,TM) tiles above
            vmem_limit_bytes=32 * 1024 * 1024,
        ),
        cost_estimate=pl.CostEstimate(
            flops=flops, transcendentals=0, bytes_accessed=bytes_accessed),
    )(w2, patches, b2)

    # strip padding; layout is already (N, OC, OH*OW) -> NCHW with no transpose
    return out_padded[:, :OC, :M].reshape(N, OC, OH, OW)


if __name__ == "__main__":
    # small shapes consistent with the module: batch=2, input_size=4,
    # spatial=16x16, output channels=8, kernel_size=4, stride=2, padding=1
    N, C, H, W = 2, 4, 16, 16
    OC, KH, KW = 8, 4, 4
    stride, padding = 2, 1

    key = jax.random.PRNGKey(0)
    kx, kw, kb = jax.random.split(key, 3)
    x = jax.random.normal(kx, (N, C, H, W), jnp.float32)

    # deterministic parameter init (mimics PyTorch Conv2d uniform(-1/sqrt(fan_in),.))
    fan_in = C * KH * KW
    bound = 1.0 / (fan_in ** 0.5)
    weight = jax.random.uniform(kw, (OC, C, KH, KW), jnp.float32, -bound, bound)
    bias = jax.random.uniform(kb, (OC,), jnp.float32, -bound, bound)
    # TODO(synk): spectral_normed=True path (power-iteration weight rescale) not
    # implemented; module default is spectral_normed=False.

    out = conv2d_pallas(x, weight, bias, stride=stride, padding=padding)
    out = jax.block_until_ready(out)

    OH = (H + 2 * padding - KH) // stride + 1
    OW = (W + 2 * padding - KW) // stride + 1
    assert out.shape == (N, OC, OH, OW)

    # reference with the same bf16 inputs / f32 accumulation as the kernel
    ref_bf16 = jax.lax.conv_general_dilated(
        x.astype(jnp.bfloat16), weight.astype(jnp.bfloat16),
        window_strides=(stride, stride),
        padding=[(padding, padding), (padding, padding)],
        dimension_numbers=("NCHW", "OIHW", "NCHW"),
        preferred_element_type=jnp.float32,
    ) + bias[None, :, None, None]
    assert jnp.allclose(out, ref_bf16, atol=2e-3, rtol=2e-3)

    # loose sanity check against the exact f32 conv (bf16 input quantization)
    ref_f32 = jax.lax.conv_general_dilated(
        x, weight, window_strides=(stride, stride),
        padding=[(padding, padding), (padding, padding)],
        dimension_numbers=("NCHW", "OIHW", "NCHW"),
    ) + bias[None, :, None, None]
    assert jnp.allclose(out, ref_f32, atol=3e-2, rtol=3e-2)

    print("KERNEL_OK")
</pallas_src>

<mosaic_0001>
module attributes {stable_mosaic.version = 11 : i64} {
  func.func @_conv_matmul_kernel(%arg0: i32, %arg1: i32, %arg2: i32, %arg3: memref<8x128xbf16, #tpu.memory_space<vmem>>, %arg4: memref<1x128x128xbf16, #tpu.memory_space<vmem>>, %arg5: memref<8x1xf32, #tpu.memory_space<vmem>>, %arg6: memref<1x8x128xf32, #tpu.memory_space<vmem>>, %arg7: memref<8x128xf32, #tpu.memory_space<vmem>>) attributes {dimension_semantics = [#tpu.dimension_semantics<parallel>, #tpu.dimension_semantics<parallel>, #tpu.dimension_semantics<arbitrary>], iteration_bounds = array<i64: 2, 1, 1>, scalar_prefetch = 0 : i64, scratch_operands = 1 : i64, tpu.core_type = #tpu.core_type<tc>, window_params = [{transform_indices = @transform_0, window_bounds = array<i64: 8, 128>}, {transform_indices = @transform_1, window_bounds = array<i64: 1, 128, 128>}, {pipeline_mode = #tpu.pipeline_mode<synchronous>, transform_indices = @transform_2, window_bounds = array<i64: 8, 1>}, {transform_indices = @transform_3, window_bounds = array<i64: 1, 8, 128>}]} {
    %c0_i32 = arith.constant 0 : i32
    %0 = arith.cmpi eq, %arg2, %c0_i32 : i32
    %1 = arith.extui %0 : i1 to i32
    %c0_i32_0 = arith.constant 0 : i32
    %2 = arith.cmpi ne, %1, %c0_i32_0 : i32
    scf.if %2 {
      %cst_11 = arith.constant 0.000000e+00 : f32
      %13 = vector.broadcast %cst_11 : f32 to vector<8x128xf32>
      %c0_12 = arith.constant 0 : index
      %c0_13 = arith.constant 0 : index
      %14 = vector.load %arg7[%c0_12, %c0_13] : memref<8x128xf32, #tpu.memory_space<vmem>>, vector<8x128xf32>
      tpu.vector_store %arg7[%c0_12, %c0_13], %13 {strides = array<i32>} : memref<8x128xf32, #tpu.memory_space<vmem>>, vector<8x128xf32>,
    } else {
    }
    %c0 = arith.constant 0 : index
    %c0_1 = arith.constant 0 : index
    %3 = vector.load %arg7[%c0, %c0_1] : memref<8x128xf32, #tpu.memory_space<vmem>>, vector<8x128xf32>
    %c0_2 = arith.constant 0 : index
    %c0_3 = arith.constant 0 : index
    %4 = vector.load %arg3[%c0_2, %c0_3] : memref<8x128xbf16, #tpu.memory_space<vmem>>, vector<8x128xbf16>
    %c0_4 = arith.constant 0 : index
    %c0_5 = arith.constant 0 : index
    %c0_6 = arith.constant 0 : index
    %5 = vector.load %arg4[%c0_4, %c0_5, %c0_6] : memref<1x128x128xbf16, #tpu.memory_space<vmem>>, vector<1x128x128xbf16>
    %6 = vector.shape_cast %5 : vector<1x128x128xbf16> to vector<128x128xbf16>
    %cst = arith.constant dense<0.000000e+00> : vector<8x128xf32>
    %7 = tpu.matmul %4, %6, %cst {dimension_numbers = #tpu.dot_dimension_numbers<[1], [0], [0], [1], [0, 0, 1, 1], [], []>} : vector<8x128xbf16>, vector<128x128xbf16>, vector<8x128xf32> -> vector<8x128xf32>
    %8 = arith.addf %3, %7 : vector<8x128xf32>
    %c0_7 = arith.constant 0 : index
    %c0_8 = arith.constant 0 : index
    %9 = vector.load %arg7[%c0_7, %c0_8] : memref<8x128xf32, #tpu.memory_space<vmem>>, vector<8x128xf32>
    tpu.vector_store %arg7[%c0_7, %c0_8], %8 {strides = array<i32>} : memref<8x128xf32, #tpu.memory_space<vmem>>, vector<8x128xf32>,
    %c0_i32_9 = arith.constant 0 : i32
    %10 = arith.cmpi eq, %arg2, %c0_i32_9 : i32
    %11 = arith.extui %10 : i1 to i32
    %c0_i32_10 = arith.constant 0 : i32
    %12 = arith.cmpi ne, %11, %c0_i32_10 : i32
    scf.if %12 {
      %c0_11 = arith.constant 0 : index
      %c0_12 = arith.constant 0 : index
      %13 = vector.load %arg7[%c0_11, %c0_12] : memref<8x128xf32, #tpu.memory_space<vmem>>, vector<8x128xf32>
      %c0_13 = arith.constant 0 : index
      %c0_14 = arith.constant 0 : index
      %14 = vector.load %arg5[%c0_13, %c0_14] : memref<8x1xf32, #tpu.memory_space<vmem>>, vector<8x1xf32>
      %15 = vector.broadcast %14 : vector<8x1xf32> to vector<8x128xf32>
      %16 = arith.addf %13, %15 : vector<8x128xf32>
      %c0_15 = arith.constant 0 : index
      %c0_16 = arith.constant 0 : index
      %c0_17 = arith.constant 0 : index
      %17 = vector.load %arg6[%c0_15, %c0_16, %c0_17] : memref<1x8x128xf32, #tpu.memory_space<vmem>>, vector<1x8x128xf32>
      %18 = vector.shape_cast %17 : vector<1x8x128xf32> to vector<8x128xf32>
      %19 = vector.shape_cast %16 : vector<8x128xf32> to vector<1x8x128xf32>
      tpu.vector_store %arg6[%c0_15, %c0_16, %c0_17], %19 {strides = array<i32>} : memref<1x8x128xf32, #tpu.memory_space<vmem>>, vector<1x8x128xf32>,
    } else {
    }
    return
  }
  func.func @transform_0(%arg0: i32, %arg1: i32, %arg2: i32) -> (i32, i32) {
    %c0_i32 = arith.constant 0 : i32
    %c0_i32_0 = arith.constant 0 : i32
    return %c0_i32, %arg2 : i32, i32
  }
  func.func @transform_1(%arg0: i32, %arg1: i32, %arg2: i32) -> (i32, i32, i32) {
    %c0_i32 = arith.constant 0 : i32
    return %arg0, %arg2, %arg1 : i32, i32, i32
  }
  func.func @transform_2(%arg0: i32, %arg1: i32, %arg2: i32) -> (i32, i32) {
    %c0_i32 = arith.constant 0 : i32
    %c0_i32_0 = arith.constant 0 : i32
    %c0_i32_1 = arith.constant 0 : i32
    return %c0_i32, %c0_i32_0 : i32, i32
  }
  func.func @transform_3(%arg0: i32, %arg1: i32, %arg2: i32) -> (i32, i32, i32) {
    %c0_i32 = arith.constant 0 : i32
    %c0_i32_0 = arith.constant 0 : i32
    return %arg0, %c0_i32, %arg1 : i32, i32, i32
  }
}

</mosaic_0001>

<llo_original>
// kernel: conv2d_pallas.1
$region0: #{conv2d_pallas.1}
  #allocation0 [shape = 'u32[]', space=smem, size = 0x4, offset = 0x4, fixed_abs, tag = 'smem constant byte address 0x4 - core index']
  #allocation1 [shape = 'u32[72,128]{1,0:T(1,128)}', space=vmem, size = 0x9000, scoped, tag = 'internal scratch']
  #allocation2 [shape = 'f32[8,128]{1,0:T(8,128)}', space=vmem, size = 0x1000, scoped, tag = 'scratch operand']
  %s0 = inlined_call_operand.vmem [shape: bf16[8,128], index: 0, kind: input, shape index: {}]
  %s1 = inlined_call_operand.vmem [shape: bf16[2,128,128], index: 1, kind: input, shape index: {}]
  %s2 = inlined_call_operand.vmem [shape: f32[8,1], index: 2, kind: input, shape index: {}]
  %s3 = inlined_call_operand.vmem [shape: f32[2,8,128], index: 3, kind: output, shape index: {}]
  %s4 = sld [smem:[#allocation0]]
  $region53: #{conv2d_pallas.1} parent=0
    _
  %s6 = ssub.s32 1, %s4
  %s7 = scalar_select 0, %s6, %s4
  loop: start=0, step=1, limit=4
  $region2: #{conv2d_pallas.1} parent=0 // loop_pre_header
    _
  $region3: #{conv2d_pallas.1} parent=0 // loop_header
    %s9 = sphi 0, %s13
    %p10 = scmp.ge.s32.totalorder %s9, 4
    %s16 = sphi 0, %s35
    %s17 = sphi 0, %s31
    %s18 = sphi 0, %s27
    %s19 = sphi 0, %s16
    %s20 = sphi 0, %s17
    %s21 = sphi 0, %s18
    %s22 = sphi 0, %s19
    %s23 = sphi 0, %s20
    %s24 = sphi 0, %s21
    %s38 = sphi 0, %s40
    %s41 = sphi 0, %s38
    %s42 = sphi 0, %s41
    %s58 = sphi 0, %s42
    %s68 = sphi 0, %s70
    %s71 = sphi 0, %s68
    %s72 = sphi 0, %s71
    %s88 = sphi 0, %s72
    %s92 = sphi 0, %s92
    %s94 = sphi 0, %s92
    %s95 = sphi 0, %s94
    %s109 = sphi 0, %s95
    %s117 = sphi 0, %s119
    %s120 = sphi 0, %s117
    %s121 = sphi 0, %s120
    %s137 = sphi 0, %s121
  $region4: #{conv2d_pallas.1} parent=0 // loop_header_branch
    %12 = sbr.rel (%p10) target = $region8
  $region5: #{conv2d_pallas.1} parent=0 // loop_body
    %s14 = ssub.s32 %s9, 1
    %s15 = ssub.s32 %s9, 2
    %s25 = sadd.s32 1, %s18
    %p26 = scmp.ge.s32.totalorder %s25, 1
    %s27 = scalar_select %p26, 0, %s25
    %s28 = sadd.s32 1, %s17
    %s29 = scalar_select %p26, %s28, %s17
    %p30 = scmp.ge.s32.totalorder %s29, 1
    %s31 = scalar_select %p30, 0, %s29
    %s32 = sadd.s32 1, %s16
    %s33 = scalar_select %p30, %s32, %s16
    %p34 = scmp.ge.s32.totalorder %s33, 2
    %s35 = scalar_select %p34, 0, %s33
    %s36 = ssub.s32 %s18, %s27
    %p37 = scmp.eq.s32.totalorder %s36, 0
    %s39 = sadd.s32 %s38, 1
    %s40 = scalar_select %p37, %s38, %s39
    %p43 = pneg %p37
    %p44 = scmp.eq.s32.totalorder %s9, 1
    %p45 = por %p43, %p44
    %p46 = scmp.ne.s32.totalorder %s38, %s41
    %p47 = scmp.eq.s32.totalorder %s9, 0
    %p48 = por %p46, %p47
    %p49 = scmp.ne.s32.totalorder %s38, %s41
    %p50 = scmp.eq.s32.totalorder %s14, 1
    %p51 = por %p49, %p50
    %p52 = scmp.ne.s32.totalorder %s41, %s42
    %p53 = scmp.eq.s32.totalorder %s14, 0
    %p54 = por %p52, %p53
    %p55 = scmp.ne.s32.totalorder %s41, %s42
    %p56 = scmp.eq.s32.totalorder %s15, 1
    %p57 = por %p55, %p56
    %p59 = scmp.ne.s32.totalorder %s42, %s58
    %p60 = scmp.eq.s32.totalorder %s15, 0
    %p61 = por %p59, %p60
    %s62 = ssub.s32 %s16, %s35
    %s63 = ssub.s32 %s18, %s27
    %s64 = sor.u32 %s62, %s63
    %s65 = ssub.s32 %s17, %s31
    %s66 = sor.u32 %s64, %s65
    %p67 = scmp.eq.s32.totalorder %s66, 0
    %s69 = sadd.s32 %s68, 1
    %s70 = scalar_select %p67, %s68, %s69
    %p73 = pneg %p67
    %p74 = scmp.eq.s32.totalorder %s9, 1
    %p75 = por %p73, %p74
    %p76 = scmp.ne.s32.totalorder %s68, %s71
    %p77 = scmp.eq.s32.totalorder %s9, 0
    %p78 = por %p76, %p77
    %p79 = scmp.ne.s32.totalorder %s68, %s71
    %p80 = scmp.eq.s32.totalorder %s14, 1
    %p81 = por %p79, %p80
    %p82 = scmp.ne.s32.totalorder %s71, %s72
    %p83 = scmp.eq.s32.totalorder %s14, 0
    %p84 = por %p82, %p83
    %p85 = scmp.ne.s32.totalorder %s71, %s72
    %p86 = scmp.eq.s32.totalorder %s15, 1
    %p87 = por %p85, %p86
    %p89 = scmp.ne.s32.totalorder %s72, %s88
    %p90 = scmp.eq.s32.totalorder %s15, 0
    %p91 = por %p89, %p90
    %s93 = sadd.s32 %s92, 1
    %p96 = scmp.eq.s32.totalorder %s9, 1
    %p97 = scmp.ne.s32.totalorder %s92, %s94
    %p98 = scmp.eq.s32.totalorder %s9, 0
    %p99 = por %p97, %p98
    %p100 = scmp.ne.s32.totalorder %s92, %s94
    %p101 = scmp.eq.s32.totalorder %s14, 1
    %p102 = por %p100, %p101
    %p103 = scmp.ne.s32.totalorder %s94, %s95
    %p104 = scmp.eq.s32.totalorder %s14, 0
    %p105 = por %p103, %p104
    %p106 = scmp.ne.s32.totalorder %s94, %s95
    %p107 = scmp.eq.s32.totalorder %s15, 1
    %p108 = por %p106, %p107
    %p110 = scmp.ne.s32.totalorder %s95, %s109
    %p111 = scmp.eq.s32.totalorder %s15, 0
    %p112 = por %p110, %p111
    %s113 = ssub.s32 %s16, %s35
    %s114 = ssub.s32 %s17, %s31
    %s115 = sor.u32 %s113, %s114
    %p116 = scmp.eq.s32.totalorder %s115, 0
    %s118 = sadd.s32 %s117, 1
    %s119 = scalar_select %p116, %s117, %s118
    %p122 = pneg %p116
    %p123 = scmp.eq.s32.totalorder %s9, 1
    %p124 = por %p122, %p123
    %p125 = scmp.ne.s32.totalorder %s117, %s120
    %p126 = scmp.eq.s32.totalorder %s9, 0
    %p127 = por %p125, %p126
    %p128 = scmp.ne.s32.totalorder %s117, %s120
    %p129 = scmp.eq.s32.totalorder %s14, 1
    %p130 = por %p128, %p129
    %p131 = scmp.ne.s32.totalorder %s120, %s121
    %p132 = scmp.eq.s32.totalorder %s14, 0
    %p133 = por %p131, %p132
    %p134 = scmp.ne.s32.totalorder %s120, %s121
    %p135 = scmp.eq.s32.totalorder %s15, 1
    %p136 = por %p134, %p135
    %p138 = scmp.ne.s32.totalorder %s121, %s137
    %p139 = scmp.eq.s32.totalorder %s15, 0
    %p140 = por %p138, %p139
    %p141 = scmp.le.s32.totalorder 1, %s9
    %p142 = scmp.lt.s32.totalorder %s9, 3
    %p143 = pnand %p141, %p142
    %p144 = pneg %p143
    // Predicated region
    $region9: #{conv2d_pallas.1} parent=5 // pred_check
      _
    $region10: #{conv2d_pallas.1} parent=5 // pred_check_branch
      %146 = sbr.rel (%p143) target = $region12
    $region11: #{conv2d_pallas.1} parent=5 // pred_region
      %s147 = ssub.s32 %s9, 1
      // Predicated region
      $region13: #{conv2d_pallas.1} parent=11 // pred_check
        %p148 = pneg %p54
      $region14: #{conv2d_pallas.1} parent=11 // pred_check_branch
        %150 = sbr.rel (%p148) target = $region16
      $region15: #{conv2d_pallas.1} parent=11 // pred_region
        %p151 = scmp.lt.s32.totalorder %s21, 0
        %s152 = scalar_select %p151, %s21, 0
        %s153 = smul.addr %s152, 4
        %s154 = scalar_lea.vmem %s0, %s153
      $region16: #{conv2d_pallas.1} parent=11 // pred_fallthru
        _
      // Predicated region
      $region17: #{conv2d_pallas.1} parent=11 // pred_check
        %p155 = pneg %p105
      $region18: #{conv2d_pallas.1} parent=11 // pred_check_branch
        %157 = sbr.rel (%p155) target = $region20
      $region19: #{conv2d_pallas.1} parent=11 // pred_region
        _
      $region20: #{conv2d_pallas.1} parent=11 // pred_fallthru
        _
    $region12: #{conv2d_pallas.1} parent=5 // pred_fallthru
      _
    %p158 = scmp.lt.s32.totalorder %s9, 2
    // Predicated region
    $region21: #{conv2d_pallas.1} parent=5 // pred_check
      %p159 = pneg %p158
    $region22: #{conv2d_pallas.1} parent=5 // pred_check_branch
      %161 = sbr.rel (%p159) target = $region24
    $region23: #{conv2d_pallas.1} parent=5 // pred_region
      // Predicated region
      $region25: #{conv2d_pallas.1} parent=23 // pred_check
        %p162 = pneg %p78
      $region26: #{conv2d_pallas.1} parent=23 // pred_check_branch
        %164 = sbr.rel (%p162) target = $region28
      $region27: #{conv2d_pallas.1} parent=23 // pred_region
        %s165 = smul.u32 16, %s18
        %p166 = scmp.lt.s32.totalorder %s16, 1
        %s167 = scalar_select %p166, %s16, 1
        %p168 = scmp.lt.s32.totalorder %s165, 15
        %s169 = scalar_select %p168, %s165, 15
        %p170 = scmp.lt.s32.totalorder %s17, 0
        %s171 = scalar_select %p170, %s17, 0
        %s172 = sadd.s32 %s171, %s169
        %s173 = smul.addr %s167, 16
        %s174 = sadd.s32 %s172, %s173
        %s175 = smul.addr %s174, 4
        %s176 = scalar_lea.vmem %s1, %s175
        %s177 = smul.u32 16, %s18
      $region28: #{conv2d_pallas.1} parent=23 // pred_fallthru
        _
    $region24: #{conv2d_pallas.1} parent=5 // pred_fallthru
      _
    %p178 = scmp.le.s32.totalorder 1, %s9
    %p179 = scmp.lt.s32.totalorder %s9, 3
    %p180 = pnand %p178, %p179
    %p181 = pneg %p180
    // Predicated region
    $region29: #{conv2d_pallas.1} parent=5 // pred_check
      _
    $region30: #{conv2d_pallas.1} parent=5 // pred_check_branch
      %183 = sbr.rel (%p180) target = $region32
    $region31: #{conv2d_pallas.1} parent=5 // pred_region
      %s184 = ssub.s32 %s9, 1
      %p185 = scmp.lt.s32.totalorder %s21, 0
      %s186 = scalar_select %p185, %s21, 0
      %s187 = smul.addr %s186, 4
      %s188 = scalar_lea.vmem %s0, %s187
      %p189 = pneg %p54
      %p190 = pneg %p51
      %s191 = smul.u32 16, %s21
      %p192 = scmp.lt.s32.totalorder %s19, 1
      %s193 = scalar_select %p192, %s19, 1
      %p194 = scmp.lt.s32.totalorder %s191, 15
      %s195 = scalar_select %p194, %s191, 15
      %p196 = scmp.lt.s32.totalorder %s20, 0
      %s197 = scalar_select %p196, %s20, 0
      %s198 = sadd.s32 %s197, %s195
      %s199 = smul.addr %s193, 16
      %s200 = sadd.s32 %s198, %s199
      %s201 = smul.addr %s200, 4
      %s202 = scalar_lea.vmem %s1, %s201
      %p203 = pneg %p84
      %p204 = pneg %p81
      %p205 = pneg %p105
      %p206 = pneg %p102
      %p207 = pneg %p133
      %p208 = pneg %p130
      %p209 = scmp.lt.s32.totalorder %s19, 1
      %s210 = scalar_select %p209, %s19, 1
      %p211 = scmp.lt.s32.totalorder %s20, 0
      %s212 = scalar_select %p211, %s20, 0
      %s213 = sadd.s32 %s212, %s210
      %s214 = smul.addr %s213, 8
      %s215 = scalar_lea.vmem %s3, %s214
      %p216 = scmp.lt.s32.totalorder %s21, 0
      %s217 = scalar_select %p216, %s21, 0
      %s218 = smul.addr %s217, 4
      %s219 = scalar_lea.vmem %s0, %s218
      %s220 = smul.u32 16, %s21
      %p221 = scmp.lt.s32.totalorder %s19, 1
      %s222 = scalar_select %p221, %s19, 1
      %p223 = scmp.lt.s32.totalorder %s220, 15
      %s224 = scalar_select %p223, %s220, 15
      %p225 = scmp.lt.s32.totalorder %s20, 0
      %s226 = scalar_select %p225, %s20, 0
      %s227 = sadd.s32 %s226, %s224
      %s228 = smul.addr %s222, 16
      %s229 = sadd.s32 %s227, %s228
      %s230 = smul.addr %s229, 4
      %s231 = scalar_lea.vmem %s1, %s230
      %s232 = smul.u32 16, %s21
      %p233 = scmp.lt.s32.totalorder %s19, 1
      %s234 = scalar_select %p233, %s19, 1
      %p235 = scmp.lt.s32.totalorder %s20, 0
      %s236 = scalar_select %p235, %s20, 0
      %s237 = sadd.s32 %s236, %s234
      %s238 = smul.addr %s237, 8
      %s239 = scalar_lea.vmem %s3, %s238
      %p240 = scmp.eq.s32.totalorder %s21, 0
      // Predicated region
      $region33: #{conv2d_pallas.1} parent=31 // pred_check
        %p241 = pneg %p240
      $region34: #{conv2d_pallas.1} parent=31 // pred_check_branch
        %243 = sbr.rel (%p241) target = $region36
      $region35: #{conv2d_pallas.1} parent=31 // pred_region
        %244 = vst [vmem:[#allocation2] sm:$0xff] 0.0
      $region36: #{conv2d_pallas.1} parent=31 // pred_fallthru
        _
      %v245 = vld [vmem:[#allocation2] sm:$0xff]
      %v246 = vld [vmem:[%s219] sm:$0xf]
      %v247 = vld [vmem:[%s231] sm:$0xf]
      %v248 = vld [vmem:[%s231 + $0x4] sm:$0xf]
      %v249 = vld [vmem:[%s231 + $0x8] sm:$0xf]
      %v250 = vld [vmem:[%s231 + $0xc] sm:$0xf]
      %v251 = vld [vmem:[%s231 + $0x10] sm:$0xf]
      %v252 = vld [vmem:[%s231 + $0x14] sm:$0xf]
      %v253 = vld [vmem:[%s231 + $0x18] sm:$0xf]
      %v254 = vld [vmem:[%s231 + $0x1c] sm:$0xf]
      %v255 = vld [vmem:[%s231 + $0x20] sm:$0xf]
      %v256 = vld [vmem:[%s231 + $0x24] sm:$0xf]
      %v257 = vld [vmem:[%s231 + $0x28] sm:$0xf]
      %v258 = vld [vmem:[%s231 + $0x2c] sm:$0xf]
      %v259 = vld [vmem:[%s231 + $0x30] sm:$0xf]
      %v260 = vld [vmem:[%s231 + $0x34] sm:$0xf]
      %v261 = vld [vmem:[%s231 + $0x38] sm:$0xf]
      %v262 = vld [vmem:[%s231 + $0x3c] sm:$0xf]
      %v279 = vunpack.c.l.b16 %v247
      %v280 = vunpack.c.l.b16 %v248
      %v281 = vunpack.c.l.b16 %v249
      %v282 = vunpack.c.l.b16 %v250
      %v283 = vunpack.c.l.b16 %v251
      %v284 = vunpack.c.l.b16 %v252
      %v285 = vunpack.c.l.b16 %v253
      %v286 = vunpack.c.l.b16 %v254
      %v287 = vunpack.c.l.b16 %v255
      %v288 = vunpack.c.l.b16 %v256
      %v289 = vunpack.c.l.b16 %v257
      %v290 = vunpack.c.l.b16 %v258
      %v291 = vunpack.c.l.b16 %v259
      %v292 = vunpack.c.l.b16 %v260
      %v293 = vunpack.c.l.b16 %v261
      %v294 = vunpack.c.l.b16 %v262
      %v295 = vpack.c.b16 %v280, %v279
      %v296 = vpack.c.b16 %v282, %v281
      %v297 = vpack.c.b16 %v284, %v283
      %v298 = vpack.c.b16 %v286, %v285
      %v299 = vpack.c.b16 %v288, %v287
      %v300 = vpack.c.b16 %v290, %v289
      %v301 = vpack.c.b16 %v292, %v291
      %v302 = vpack.c.b16 %v294, %v293
      %311 = vmatpush.bf16.msra.mxu0 %v302
      %312 = vmatpush.bf16.msra.mxu0 %v301
      %313 = vmatpush.bf16.msra.mxu0 %v300
      %314 = vmatpush.bf16.msra.mxu0 %v299
      %315 = vmatpush.bf16.msra.mxu0 %v298
      %316 = vmatpush.bf16.msra.mxu0 %v297
      %317 = vmatpush.bf16.msra.mxu0 %v296
      %318 = vmatpush.bf16.msra.mxu0 %v295
      %319 = vmatmul.bf16.gmra.mxu0 %v246
      %v320 = vpop.f32.mrf.mxu0
      %v321 = vadd.f32 0.0, %v320
      %v322 = vpop.f32.mrf.mxu0
      %323 = vdwg.mxu0
      %v324 = vadd.f32 %v245, %v321
      %325 = vst [vmem:[#allocation2] sm:$0xff] %v324
      // Predicated region
      $region37: #{conv2d_pallas.1} parent=31 // pred_check
        %p326 = pneg %p240
      $region38: #{conv2d_pallas.1} parent=31 // pred_check_branch
        %328 = sbr.rel (%p326) target = $region40
      $region39: #{conv2d_pallas.1} parent=31 // pred_region
        %v329 = vld [vmem:[#allocation2] sm:$0xff]
        %v330 = vld [vmem:[%s2] sm:$0xff]
        %332 = vset.pattern.permute.xlu0 0
        %333 = vperm.xlu0 %332, %v330
        %v334 = vpop.permute.xlu0 %333
        %v336 = vadd.f32 %v329, %v334
        %337 = vst [vmem:[%s239] sm:$0xff] %v336
      $region40: #{conv2d_pallas.1} parent=31 // pred_fallthru
        _
      %p338 = scmp.lt.s32.totalorder %s19, 1
      %s339 = scalar_select %p338, %s19, 1
      %p340 = scmp.lt.s32.totalorder %s20, 0
      %s341 = scalar_select %p340, %s20, 0
      %s342 = sadd.s32 %s341, %s339
      %s343 = smul.addr %s342, 8
      %s344 = scalar_lea.vmem %s3, %s343
      // Predicated region
      $region41: #{conv2d_pallas.1} parent=31 // pred_check
        %p345 = pneg %p130
      $region42: #{conv2d_pallas.1} parent=31 // pred_check_branch
        %347 = sbr.rel (%p345) target = $region44
      $region43: #{conv2d_pallas.1} parent=31 // pred_region
        _
      $region44: #{conv2d_pallas.1} parent=31 // pred_fallthru
        _
    $region32: #{conv2d_pallas.1} parent=5 // pred_fallthru
      _
    %p348 = scmp.le.s32.totalorder 2, %s9
    // Predicated region
    $region45: #{conv2d_pallas.1} parent=5 // pred_check
      %p349 = pneg %p348
    $region46: #{conv2d_pallas.1} parent=5 // pred_check_branch
      %351 = sbr.rel (%p349) target = $region48
    $region47: #{conv2d_pallas.1} parent=5 // pred_region
      %s352 = ssub.s32 %s9, 2
      // Predicated region
      $region49: #{conv2d_pallas.1} parent=47 // pred_check
        %p353 = pneg %p136
      $region50: #{conv2d_pallas.1} parent=47 // pred_check_branch
        %355 = sbr.rel (%p353) target = $region52
      $region51: #{conv2d_pallas.1} parent=47 // pred_region
        %p356 = scmp.lt.s32.totalorder %s22, 1
        %s357 = scalar_select %p356, %s22, 1
        %p358 = scmp.lt.s32.totalorder %s23, 0
        %s359 = scalar_select %p358, %s23, 0
        %s360 = sadd.s32 %s359, %s357
        %s361 = smul.addr %s360, 8
        %s362 = scalar_lea.vmem %s3, %s361
      $region52: #{conv2d_pallas.1} parent=47 // pred_fallthru
        _
    $region48: #{conv2d_pallas.1} parent=5 // pred_fallthru
      _
  $region6: #{conv2d_pallas.1} parent=0 // loop_footer
    %s13 = sadd.s32 1, %s9
  $region7: #{conv2d_pallas.1} parent=0 // loop_footer_branch
    %8 = sbr.rel target = $region3
  $region8: #{conv2d_pallas.1} parent=0 // loop_exit
    _

</llo_original>
